<compile_context>
chip_gen: v6e
topology: v6e:2x2x1
jax: 0.10.0
libtpu: 0.0.40
codegen_flags: <defaults>
</compile_context>

<pallas_src>
import functools

import jax
import jax.numpy as jnp
from jax.experimental import pallas as pl
from jax.experimental.pallas import tpu as pltpu

F32 = jnp.float32
BF16 = jnp.bfloat16
LANE = 128


def _round_up(v, m):
    return (v + m - 1) // m * m


def _vmem_budget_bytes():
    """~75% of physical VMEM (v7x has only 64 MiB vs 128 MiB on v5e/v6e)."""
    try:
        cap = int(pltpu.get_tpu_info().vmem_capacity_bytes)
        return (cap * 3) // 4
    except Exception:  # query unavailable -> conservative (v7x-safe) fallback
        return 48 * 1024 * 1024


# ------------------------------ in-kernel math --------------------------------

def _lstm_out(gates, H):
    # gate layout [i | g | o]; the forget gate is exactly dead since c0 = 0.
    i = jax.nn.sigmoid(gates[:, :H])
    g = jnp.tanh(gates[:, H:2 * H])
    o = jax.nn.sigmoid(gates[:, 2 * H:3 * H])
    return o * jnp.tanh(i * g)


def _stage1_body(a_tile, xw1, wcat, bias, H):
    """h1 = BN1(relu(A_tile @ (X@W1) + b1)); return lane-dense [h1 | h1@W2 | 0].

    The packing is done with one MXU op: bf16(h1) @ [I | W2 | 0]."""
    b1, sc1, sh1 = bias[0:1, :H], bias[1:2, :H], bias[2:3, :H]
    h = jnp.dot(a_tile, xw1, preferred_element_type=F32) + b1
    h1 = jnp.maximum(h, 0.0) * sc1 + sh1
    slab = jnp.dot(h1.astype(BF16), wcat, preferred_element_type=F32)
    return slab.astype(BF16)


def _stage2_body(a_tile, slab1_all, slab1_tile, wslab, bias, H, W):
    """GCN2+BN2, LSTM1, LSTM2, fc1 (skip folded into bias), fc2 for one tile.

    wslab blocks (each W lanes, zero-padded): 0 wl1a (on h1), 1 wl1b (on h2),
    2 [wl2 | wfc1_hn1] (on hn1), 3 wfc1_hn2 (on hn2), 4 wfc2 (on z)."""
    b2, sc2, sh2 = bias[3:4, :H], bias[4:5, :H], bias[5:6, :H]

    # Aggregate the whole lane-dense stage-1 slab; a 128-wide MXU pass costs
    # the same as a 32-wide one, and only the h1@W2 columns are needed here.
    agg = jnp.dot(a_tile, slab1_all, preferred_element_type=F32)     # [TM, SW]
    h2 = jnp.maximum(agg[:, H:2 * H] + b2, 0.0) * sc2 + sh2          # BN2 folded
    h1_tile = slab1_tile[:, :H]                                      # bf16

    # LSTM1 (seq_len=1, h0=c0=0 -> weight_hh and forget gate are exactly dead).
    g1 = (jnp.dot(h1_tile, wslab[:, 0:W], preferred_element_type=F32)
          + jnp.dot(h2.astype(BF16), wslab[:, W:2 * W],
                    preferred_element_type=F32)
          + bias[6:7, :])                                            # bl1 (padded)
    hn1 = _lstm_out(g1, H)

    # LSTM2 gates and the fc1 hn1-term share the hn1 operand -> one matmul.
    hn1b = hn1.astype(BF16)
    mix = (jnp.dot(hn1b, wslab[:, 2 * W:3 * W], preferred_element_type=F32)
           + bias[7:8, :])                                           # bl2 (padded)
    hn2 = _lstm_out(mix, H)

    z = (mix[:, 3 * H:4 * H]                                         # hn1 @ wfc1_a
         + jnp.dot(hn2.astype(BF16), wslab[:, 3 * W:4 * W],
                   preferred_element_type=F32)[:, :H]
         + bias[8:9, :H])                                            # bfc1 + skip
    z = jnp.maximum(z, 0.0)
    return jnp.dot(z.astype(BF16), wslab[:, 4 * W:5 * W],
                   preferred_element_type=F32) + bias[9:10, :]


# --------------------------------- kernels ------------------------------------

def gcn1_kernel(a_ref, xw1_ref, wcat_ref, bias_ref, slab1_ref, *, H):
    slab1_ref[...] = _stage1_body(a_ref[...], xw1_ref[...], wcat_ref[...],
                                  bias_ref[...], H)


def head_kernel(a_ref, slab1_all_ref, slab1_tile_ref, wslab_ref, bias_ref,
                out_ref, *, H, W):
    out_ref[...] = _stage2_body(a_ref[...], slab1_all_ref[...],
                                slab1_tile_ref[...], wslab_ref[...],
                                bias_ref[...], H, W)


def fused_kernel(a_ref, xw1_ref, wcat_ref, wslab_ref, bias_ref, out_ref, *, H, W):
    a = a_ref[...]
    bias = bias_ref[...]
    slab1 = _stage1_body(a, xw1_ref[...], wcat_ref[...], bias, H)
    out_ref[...] = _stage2_body(a, slab1, slab1, wslab_ref[...], bias, H, W)


# ---------------------------- wrapper / params ---------------------------------

def prepare_params(p):
    """Fold BN, drop dead LSTM weights, fuse shared-operand head matmuls, and
    pack everything into lane-aligned bf16 weight slabs."""
    H = p["w1"].shape[1]
    nout = p["wfc2"].shape[1]
    assert nout <= LANE, "fc2 output must fit one 128-lane block"
    SW = max(LANE, _round_up(2 * H, LANE))                  # stage-1 slab width
    W = max(LANE, _round_up(4 * H, LANE), _round_up(nout, LANE))

    sc1 = p["g1"] * jax.lax.rsqrt(p["rv1"] + 1e-5)
    sh1 = p["be1"] - p["rm1"] * sc1
    sc2 = p["g2"] * jax.lax.rsqrt(p["rv2"] + 1e-5)
    sh2 = p["be2"] - p["rm2"] * sc2

    def drop_forget(w):  # PyTorch gate order [i | f | g | o]; c0 = 0 -> f dead
        return jnp.concatenate([w[..., :H], w[..., 2 * H:]], axis=-1)

    wih1 = drop_forget(p["wih1"])                           # [2H, 3H]
    wih2 = drop_forget(p["wih2"])                           # [H, 3H]

    def blk(w):          # zero-pad a [H, k] weight to one [H, W] lane block
        return jnp.zeros((H, W), F32).at[:, :w.shape[1]].set(w)

    wslab = jnp.concatenate(
        [blk(wih1[:H]),                                     # 0: wl1a  (on h1)
         blk(wih1[H:]),                                     # 1: wl1b  (on h2)
         blk(jnp.concatenate([wih2, p["wfc1"][:H]], 1)),    # 2: [wl2|wf1a] (on hn1)
         blk(p["wfc1"][H:2 * H]),                           # 3: wf1b  (on hn2)
         blk(p["wfc2"])],                                   # 4: wf2   (on z)
        axis=1).astype(BF16)                                # [H, 5W]

    # Stage-1 packing matmul: bf16(h1) @ [I | w2 | 0] -> [h1 | h1@w2 | 0].
    wcat = jnp.zeros((H, SW), F32)
    wcat = wcat.at[:, :H].set(jnp.eye(H, dtype=F32)).at[:, H:2 * H].set(p["w2"])

    return {
        "H": H, "nout": nout, "SW": SW, "W": W,
        "w1": p["w1"],                      # kept f32; x @ w1 done wrapper-side
        "wcat": wcat.astype(BF16), "wslab": wslab,
        "b1": p["b1"], "sc1": sc1, "sh1": sh1,
        "b2": p["b2"], "sc2": sc2, "sh2": sh2,
        "bl1": drop_forget(p["bl1"]), "bl2": drop_forget(p["bl2"]),
        "bfc1": p["bfc1"], "bfc2": p["bfc2"],
        "wf1_skip": p["wfc1"][2 * H:],      # folded with mean(x) per forward call
    }


def _bias_slab(prep, bfc1_eff):
    """All per-channel vectors packed into a single [16, W] f32 slab."""
    W = prep["W"]

    def row(v):
        v = jnp.asarray(v, F32).reshape(1, -1)
        return jnp.pad(v, ((0, 0), (0, W - v.shape[1])))

    slab = jnp.concatenate(
        [row(prep["b1"]), row(prep["sc1"]), row(prep["sh1"]),
         row(prep["b2"]), row(prep["sc2"]), row(prep["sh2"]),
         row(prep["bl1"]), row(prep["bl2"]),
         row(bfc1_eff), row(prep["bfc2"])], axis=0)         # [10, W]
    return jnp.pad(slab, ((0, 16 - slab.shape[0]), (0, 0)))  # sublane-pad


def _pick_tile(n, budget, tile_m, H, SW, W):
    """Largest node-row tile (multiple of 16 for bf16 sublane packing) whose
    double-buffered A tile + resident stage-1 slab fit the VMEM budget."""
    tm = max(16, min(_round_up(tile_m, 16), _round_up(n, 16)))
    while True:
        np_ = _round_up(n, tm)
        need = (2 * (2 * tm * np_)            # double-buffered bf16 A row tile
                + 2 * np_ * (SW + H)          # resident slab1 + xw1 (bf16)
                + 2 * (2 * tm * SW)           # tiled slab1 blocks (bf16)
                + 2 * (4 * tm * W)            # double-buffered f32 out block
                + 2 * H * (SW + 5 * W) + 4 * 16 * W
                + (2 << 20))                  # slack
        if need <= budget or tm <= 16:
            return tm
        tm = max(16, _round_up(tm // 2, 16))


def mpnn_lstm_forward(x, a_norm, prep, tile_m=512, force_tiled=False):
    """Inference forward: Dropout = identity, BatchNorm1d uses running stats."""
    N = x.shape[0]
    H, nout, SW, W = prep["H"], prep["nout"], prep["SW"], prep["W"]
    budget = _vmem_budget_bytes()
    vmem_spec = pl.BlockSpec(memory_space=pltpu.MemorySpace.VMEM)

    # skip = mean(x, 0) @ fc1_skip folded into the fc1 bias (removes the only
    # other all-nodes dependency, making per-row tiling legal).
    bfc1_eff = prep["bfc1"] + jnp.mean(x, axis=0, keepdims=True) @ prep["wf1_skip"]
    bias = _bias_slab(prep, bfc1_eff)

    xw1 = (x.astype(F32) @ prep["w1"]).astype(BF16)         # GCN1 transform once

    # ---- small-graph fast path: one fused call, everything VMEM-resident ----
    Np = _round_up(N, 16)
    small_bytes = (2 * Np * Np + 2 * Np * (H + SW) + 4 * Np * W
                   + 2 * H * (SW + 5 * W) + 4 * 16 * W)
    if not force_tiled and small_bytes <= min(budget // 2, 24 * 1024 * 1024):
        a_bf = jnp.zeros((Np, Np), BF16).at[:N, :N].set(a_norm.astype(BF16))
        xw1p = jnp.zeros((Np, H), BF16).at[:N].set(xw1)
        out_pad = pl.pallas_call(
            functools.partial(fused_kernel, H=H, W=W),
            out_shape=jax.ShapeDtypeStruct((Np, W), F32),
            in_specs=[vmem_spec] * 5,
            out_specs=vmem_spec,
            compiler_params=pltpu.CompilerParams(vmem_limit_bytes=budget),
            cost_estimate=pl.CostEstimate(
                flops=2 * Np * Np * (H + SW) + 2 * Np * H * (SW + 6 * W),
                transcendentals=6 * Np * H,
                bytes_accessed=small_bytes),
        )(a_bf, xw1p, prep["wcat"], prep["wslab"], bias)
        return jnp.squeeze(out_pad[:N, :nout])

    # ---- general path: two row-tiled, megacore-parallel pallas_calls --------
    # TODO(synk): for Np beyond ~24k on v7x (64 MiB VMEM) add a second grid
    # axis over A's columns with an f32 accumulator (K-tiling), and quantize A
    # to int8 (v5e/v6e) / fp8 (v7x) with a per-row scale to halve HBM bytes.
    TM = _pick_tile(N, budget, tile_m, H, SW, W)
    Np = _round_up(N, TM)
    if Np // TM == 1 and Np >= 32:
        TM = _round_up(max(16, (N + 1) // 2), 16)   # >=2 tiles keeps both v7x TCs busy
        Np = _round_up(N, TM)
    grid = (Np // TM,)

    # Padded operands built directly in the compute dtype (one materialization).
    a_bf = jnp.zeros((Np, Np), BF16).at[:N, :N].set(a_norm.astype(BF16))
    xw1p = jnp.zeros((Np, H), BF16).at[:N].set(xw1)

    cparams = pltpu.CompilerParams(dimension_semantics=("parallel",),
                                   vmem_limit_bytes=budget)

    # Stage 1: GCNConv1 + ReLU + BN1 -> lane-dense bf16 slab [h1 | h1@W2 | 0].
    # NOTE: padded rows hold relu(b1)*sc1+sh1 != 0; they never contribute
    # because the padded A columns are zero — do not reduce over slab1 rows.
    slab1 = pl.pallas_call(
        functools.partial(gcn1_kernel, H=H),
        out_shape=jax.ShapeDtypeStruct((Np, SW), BF16),
        grid=grid,
        in_specs=[pl.BlockSpec((TM, Np), lambda i: (i, 0)),   # A row tile
                  vmem_spec, vmem_spec, vmem_spec],           # xw1, wcat, bias
        out_specs=pl.BlockSpec((TM, SW), lambda i: (i, 0)),
        compiler_params=cparams,
        cost_estimate=pl.CostEstimate(
            flops=2 * Np * Np * H + 2 * Np * H * SW,
            transcendentals=0,
            bytes_accessed=2 * Np * Np + 2 * Np * (H + 2 * SW)),
    )(a_bf, xw1p, prep["wcat"], bias)

    # Stage 2: GCNConv2 + BN2 + LSTM1 + LSTM2 + fc1 + fc2.
    out_pad = pl.pallas_call(
        functools.partial(head_kernel, H=H, W=W),
        out_shape=jax.ShapeDtypeStruct((Np, W), F32),
        grid=grid,
        in_specs=[pl.BlockSpec((TM, Np), lambda i: (i, 0)),   # A row tile
                  vmem_spec,                                  # slab1 (all nodes)
                  pl.BlockSpec((TM, SW), lambda i: (i, 0)),   # slab1 (this tile)
                  vmem_spec, vmem_spec],                      # wslab, bias
        out_specs=pl.BlockSpec((TM, W), lambda i: (i, 0)),
        compiler_params=cparams,
        cost_estimate=pl.CostEstimate(
            flops=2 * Np * Np * SW + 2 * Np * H * 7 * W,
            transcendentals=6 * Np * H,
            bytes_accessed=2 * Np * Np + 4 * Np * SW + 4 * Np * W),
    )(a_bf, slab1, slab1, prep["wslab"], bias)

    return jnp.squeeze(out_pad[:N, :nout])                   # matches .squeeze()


# ------------------------- graph / params / reference --------------------------

def build_normalized_adjacency(edge_index, edge_weight, n_nodes):
    # GCN normalization: A[i, j] = weight of edge j->i ; A += I ; D^-1/2 A D^-1/2
    src, dst = edge_index[0], edge_index[1]
    a = jnp.zeros((n_nodes, n_nodes), jnp.float32).at[dst, src].add(edge_weight)
    a = a + jnp.eye(n_nodes, dtype=jnp.float32)
    deg = a.sum(axis=1)
    dis = jax.lax.rsqrt(deg)
    return a * dis[:, None] * dis[None, :]


def init_params(key, nfeat, nhid, nout):
    ks = iter(jax.random.split(key, 24))

    def rnd(shape, scale=0.1):
        return scale * jax.random.normal(next(ks), shape, dtype=jnp.float32)

    p = {}
    p["w1"], p["b1"] = rnd((nfeat, nhid)), rnd((1, nhid))
    p["g1"], p["be1"] = 1.0 + rnd((1, nhid)), rnd((1, nhid))
    p["rm1"], p["rv1"] = rnd((1, nhid)), 1.0 + jnp.abs(rnd((1, nhid)))
    p["w2"], p["b2"] = rnd((nhid, nhid)), rnd((1, nhid))
    p["g2"], p["be2"] = 1.0 + rnd((1, nhid)), rnd((1, nhid))
    p["rm2"], p["rv2"] = rnd((1, nhid)), 1.0 + jnp.abs(rnd((1, nhid)))
    # LSTM(2*nhid -> nhid): weight_ih^T [2H, 4H]; PyTorch gate order i, f, g, o
    p["wih1"] = rnd((2 * nhid, 4 * nhid))
    p["bl1"] = rnd((1, 4 * nhid)) + rnd((1, 4 * nhid))
    p["wih2"] = rnd((nhid, 4 * nhid))
    p["bl2"] = rnd((1, 4 * nhid)) + rnd((1, 4 * nhid))
    p["wfc1"], p["bfc1"] = rnd((2 * nhid + nfeat, nhid)), rnd((1, nhid))
    p["wfc2"], p["bfc2"] = rnd((nhid, nout)), rnd((1, nout))
    return p


def mpnn_lstm_reference(x, a_norm, p):
    # Pure-JAX f32 mirror of the PyTorch forward (eval mode).
    h = jnp.maximum(a_norm @ (x @ p["w1"]) + p["b1"], 0.0)
    h1 = (h - p["rm1"]) * (p["g1"] / jnp.sqrt(p["rv1"] + 1e-5)) + p["be1"]
    h = jnp.maximum(a_norm @ (h1 @ p["w2"]) + p["b2"], 0.0)
    h2 = (h - p["rm2"]) * (p["g2"] / jnp.sqrt(p["rv2"] + 1e-5)) + p["be2"]
    xc = jnp.concatenate([h1, h2], axis=1)

    def lstm_step(xin, w, b):
        i, f, g, o = jnp.split(xin @ w + b, 4, axis=1)
        c = jax.nn.sigmoid(i) * jnp.tanh(g)
        return jax.nn.sigmoid(o) * jnp.tanh(c)

    hn1 = lstm_step(xc, p["wih1"], p["bl1"])
    hn2 = lstm_step(hn1, p["wih2"], p["bl2"])
    skip = jnp.broadcast_to(jnp.mean(x, axis=0, keepdims=True),
                            (x.shape[0], x.shape[1]))
    cat = jnp.concatenate([hn1, hn2, skip], axis=1)
    z = jnp.maximum(cat @ p["wfc1"] + p["bfc1"], 0.0)
    return jnp.squeeze(z @ p["wfc2"] + p["bfc2"])


if __name__ == "__main__":
    # Spec config: nfeat=8, nhid=32, nout=1; window/dropout irrelevant at eval.
    NFEAT, NHID, NOUT = 8, 32, 1

    key = jax.random.PRNGKey(0)
    k_p, k_rest = jax.random.split(key)
    params = init_params(k_p, NFEAT, NHID, NOUT)
    prep = prepare_params(params)

    def make_graph(k, n_nodes, n_edges):
        k_x, k_e1, k_e2, k_e3 = jax.random.split(k, 4)
        xg = jax.random.normal(k_x, (n_nodes, NFEAT), dtype=jnp.float32)
        src = jax.random.randint(k_e1, (n_edges,), 0, n_nodes)
        off = jax.random.randint(k_e2, (n_edges,), 1, n_nodes)  # src != dst
        dst = (src + off) % n_nodes
        ei = jnp.stack([src, dst]).astype(jnp.int32)
        ew = jax.random.uniform(k_e3, (n_edges,), minval=0.5, maxval=1.5,
                                dtype=jnp.float32)
        return xg, build_normalized_adjacency(ei, ew, n_nodes)

    k_g1, k_g2 = jax.random.split(k_rest)

    # 1) Small graph (n_nodes=16) -> fused single-call fast path.
    x1, a1 = make_graph(k_g1, 16, 48)
    out1 = jax.block_until_ready(mpnn_lstm_forward(x1, a1, prep))
    ref1 = jax.block_until_ready(mpnn_lstm_reference(x1, a1, params))
    assert out1.shape == ref1.shape == (16,)
    d1 = float(jnp.max(jnp.abs(out1 - ref1)))
    assert jnp.allclose(out1, ref1, atol=3e-2, rtol=3e-2), f"fused max diff {d1}"

    # 2) Larger graph forced through the two-stage row-tiled pipeline
    #    (TM=16 -> grid of 4 parallel row tiles in each pallas_call).
    x2, a2 = make_graph(k_g2, 64, 192)
    out2 = jax.block_until_ready(
        mpnn_lstm_forward(x2, a2, prep, tile_m=16, force_tiled=True))
    ref2 = jax.block_until_ready(mpnn_lstm_reference(x2, a2, params))
    assert out2.shape == ref2.shape == (64,)
    d2 = float(jnp.max(jnp.abs(out2 - ref2)))
    assert jnp.allclose(out2, ref2, atol=3e-2, rtol=3e-2), f"tiled max diff {d2}"

    print("KERNEL_OK")
</pallas_src>

<mosaic_0001>
module attributes {stable_mosaic.version = 11 : i64} {
  func.func @fused_kernel(%arg0: memref<16x16xbf16, #tpu.memory_space<vmem>>, %arg1: memref<16x32xbf16, #tpu.memory_space<vmem>>, %arg2: memref<32x128xbf16, #tpu.memory_space<vmem>>, %arg3: memref<32x640xbf16, #tpu.memory_space<vmem>>, %arg4: memref<16x128xf32, #tpu.memory_space<vmem>>, %arg5: memref<16x128xf32, #tpu.memory_space<vmem>>) attributes {dimension_semantics = [], scalar_prefetch = 0 : i64, scratch_operands = 0 : i64, tpu.core_type = #tpu.core_type<tc>} {
    %c0 = arith.constant 0 : index
    %c0_0 = arith.constant 0 : index
    %0 = vector.load %arg0[%c0, %c0_0] : memref<16x16xbf16, #tpu.memory_space<vmem>>, vector<16x16xbf16>
    %c0_1 = arith.constant 0 : index
    %c0_2 = arith.constant 0 : index
    %1 = vector.load %arg4[%c0_1, %c0_2] : memref<16x128xf32, #tpu.memory_space<vmem>>, vector<16x128xf32>
    %c0_3 = arith.constant 0 : index
    %c0_4 = arith.constant 0 : index
    %2 = vector.load %arg1[%c0_3, %c0_4] : memref<16x32xbf16, #tpu.memory_space<vmem>>, vector<16x32xbf16>
    %c0_5 = arith.constant 0 : index
    %c0_6 = arith.constant 0 : index
    %3 = vector.load %arg2[%c0_5, %c0_6] : memref<32x128xbf16, #tpu.memory_space<vmem>>, vector<32x128xbf16>
    %4 = vector.extract_strided_slice %1 {offsets = [0, 0], sizes = [1, 32], strides = [1, 1]} : vector<16x128xf32> to vector<1x32xf32>
    %5 = vector.extract_strided_slice %1 {offsets = [1, 0], sizes = [1, 32], strides = [1, 1]} : vector<16x128xf32> to vector<1x32xf32>
    %6 = vector.extract_strided_slice %1 {offsets = [2, 0], sizes = [1, 32], strides = [1, 1]} : vector<16x128xf32> to vector<1x32xf32>
    %cst = arith.constant dense<0.000000e+00> : vector<16x32xf32>
    %7 = tpu.matmul %0, %2, %cst {dimension_numbers = #tpu.dot_dimension_numbers<[1], [0], [0], [1], [0, 0, 1, 1], [], []>} : vector<16x16xbf16>, vector<16x32xbf16>, vector<16x32xf32> -> vector<16x32xf32>
    %8 = vector.broadcast %4 : vector<1x32xf32> to vector<16x32xf32>
    %9 = arith.addf %7, %8 : vector<16x32xf32>
    %cst_7 = arith.constant 0.000000e+00 : f32
    %10 = vector.broadcast %cst_7 : f32 to vector<16x32xf32>
    %11 = arith.maximumf %9, %10 : vector<16x32xf32>
    %12 = vector.broadcast %5 : vector<1x32xf32> to vector<16x32xf32>
    %13 = arith.mulf %11, %12 : vector<16x32xf32>
    %14 = vector.broadcast %6 : vector<1x32xf32> to vector<16x32xf32>
    %15 = arith.addf %13, %14 : vector<16x32xf32>
    %16 = arith.truncf %15 : vector<16x32xf32> to vector<16x32xbf16>
    %cst_8 = arith.constant dense<0.000000e+00> : vector<16x128xf32>
    %17 = tpu.matmul %16, %3, %cst_8 {dimension_numbers = #tpu.dot_dimension_numbers<[1], [0], [0], [1], [0, 0, 1, 1], [], []>} : vector<16x32xbf16>, vector<32x128xbf16>, vector<16x128xf32> -> vector<16x128xf32>
    %18 = arith.truncf %17 : vector<16x128xf32> to vector<16x128xbf16>
    %c0_9 = arith.constant 0 : index
    %c0_10 = arith.constant 0 : index
    %19 = vector.load %arg3[%c0_9, %c0_10] : memref<32x640xbf16, #tpu.memory_space<vmem>>, vector<32x640xbf16>
    %20 = vector.extract_strided_slice %1 {offsets = [3, 0], sizes = [1, 32], strides = [1, 1]} : vector<16x128xf32> to vector<1x32xf32>
    %21 = vector.extract_strided_slice %1 {offsets = [4, 0], sizes = [1, 32], strides = [1, 1]} : vector<16x128xf32> to vector<1x32xf32>
    %22 = vector.extract_strided_slice %1 {offsets = [5, 0], sizes = [1, 32], strides = [1, 1]} : vector<16x128xf32> to vector<1x32xf32>
    %cst_11 = arith.constant dense<0.000000e+00> : vector<16x128xf32>
    %23 = tpu.matmul %0, %18, %cst_11 {dimension_numbers = #tpu.dot_dimension_numbers<[1], [0], [0], [1], [0, 0, 1, 1], [], []>} : vector<16x16xbf16>, vector<16x128xbf16>, vector<16x128xf32> -> vector<16x128xf32>
    %24 = vector.extract_strided_slice %23 {offsets = [0, 32], sizes = [16, 32], strides = [1, 1]} : vector<16x128xf32> to vector<16x32xf32>
    %25 = vector.broadcast %20 : vector<1x32xf32> to vector<16x32xf32>
    %26 = arith.addf %24, %25 : vector<16x32xf32>
    %cst_12 = arith.constant 0.000000e+00 : f32
    %27 = vector.broadcast %cst_12 : f32 to vector<16x32xf32>
    %28 = arith.maximumf %26, %27 : vector<16x32xf32>
    %29 = vector.broadcast %21 : vector<1x32xf32> to vector<16x32xf32>
    %30 = arith.mulf %28, %29 : vector<16x32xf32>
    %31 = vector.broadcast %22 : vector<1x32xf32> to vector<16x32xf32>
    %32 = arith.addf %30, %31 : vector<16x32xf32>
    %33 = vector.extract_strided_slice %18 {offsets = [0, 0], sizes = [16, 32], strides = [1, 1]} : vector<16x128xbf16> to vector<16x32xbf16>
    %34 = vector.extract_strided_slice %19 {offsets = [0, 0], sizes = [32, 128], strides = [1, 1]} : vector<32x640xbf16> to vector<32x128xbf16>
    %cst_13 = arith.constant dense<0.000000e+00> : vector<16x128xf32>
    %35 = tpu.matmul %33, %34, %cst_13 {dimension_numbers = #tpu.dot_dimension_numbers<[1], [0], [0], [1], [0, 0, 1, 1], [], []>} : vector<16x32xbf16>, vector<32x128xbf16>, vector<16x128xf32> -> vector<16x128xf32>
    %36 = arith.truncf %32 : vector<16x32xf32> to vector<16x32xbf16>
    %37 = vector.extract_strided_slice %19 {offsets = [0, 128], sizes = [32, 128], strides = [1, 1]} : vector<32x640xbf16> to vector<32x128xbf16>
    %cst_14 = arith.constant dense<0.000000e+00> : vector<16x128xf32>
    %38 = tpu.matmul %36, %37, %cst_14 {dimension_numbers = #tpu.dot_dimension_numbers<[1], [0], [0], [1], [0, 0, 1, 1], [], []>} : vector<16x32xbf16>, vector<32x128xbf16>, vector<16x128xf32> -> vector<16x128xf32>
    %39 = arith.addf %35, %38 : vector<16x128xf32>
    %40 = vector.extract_strided_slice %1 {offsets = [6, 0], sizes = [1, 128], strides = [1, 1]} : vector<16x128xf32> to vector<1x128xf32>
    %41 = vector.broadcast %40 : vector<1x128xf32> to vector<16x128xf32>
    %42 = arith.addf %39, %41 : vector<16x128xf32>
    %43 = vector.extract_strided_slice %42 {offsets = [0, 0], sizes = [16, 32], strides = [1, 1]} : vector<16x128xf32> to vector<16x32xf32>
    %44 = arith.negf %43 : vector<16x32xf32>
    %45 = math.exp %44 : vector<16x32xf32>
    %cst_15 = arith.constant 1.000000e+00 : f32
    %46 = vector.broadcast %cst_15 : f32 to vector<16x32xf32>
    %47 = arith.addf %46, %45 : vector<16x32xf32>
    %48 = arith.divf %46, %47 : vector<16x32xf32>
    %49 = vector.extract_strided_slice %42 {offsets = [0, 32], sizes = [16, 32], strides = [1, 1]} : vector<16x128xf32> to vector<16x32xf32>
    %50 = math.tanh %49 : vector<16x32xf32>
    %51 = vector.extract_strided_slice %42 {offsets = [0, 64], sizes = [16, 32], strides = [1, 1]} : vector<16x128xf32> to vector<16x32xf32>
    %52 = arith.negf %51 : vector<16x32xf32>
    %53 = math.exp %52 : vector<16x32xf32>
    %cst_16 = arith.constant 1.000000e+00 : f32
    %54 = vector.broadcast %cst_16 : f32 to vector<16x32xf32>
    %55 = arith.addf %54, %53 : vector<16x32xf32>
    %56 = arith.divf %54, %55 : vector<16x32xf32>
    %57 = arith.mulf %48, %50 : vector<16x32xf32>
    %58 = math.tanh %57 : vector<16x32xf32>
    %59 = arith.mulf %56, %58 : vector<16x32xf32>
    %60 = arith.truncf %59 : vector<16x32xf32> to vector<16x32xbf16>
    %61 = vector.extract_strided_slice %19 {offsets = [0, 256], sizes = [32, 128], strides = [1, 1]} : vector<32x640xbf16> to vector<32x128xbf16>
    %cst_17 = arith.constant dense<0.000000e+00> : vector<16x128xf32>
    %62 = tpu.matmul %60, %61, %cst_17 {dimension_numbers = #tpu.dot_dimension_numbers<[1], [0], [0], [1], [0, 0, 1, 1], [], []>} : vector<16x32xbf16>, vector<32x128xbf16>, vector<16x128xf32> -> vector<16x128xf32>
    %63 = vector.extract_strided_slice %1 {offsets = [7, 0], sizes = [1, 128], strides = [1, 1]} : vector<16x128xf32> to vector<1x128xf32>
    %64 = vector.broadcast %63 : vector<1x128xf32> to vector<16x128xf32>
    %65 = arith.addf %62, %64 : vector<16x128xf32>
    %66 = vector.extract_strided_slice %65 {offsets = [0, 0], sizes = [16, 32], strides = [1, 1]} : vector<16x128xf32> to vector<16x32xf32>
    %67 = arith.negf %66 : vector<16x32xf32>
    %68 = math.exp %67 : vector<16x32xf32>
    %cst_18 = arith.constant 1.000000e+00 : f32
    %69 = vector.broadcast %cst_18 : f32 to vector<16x32xf32>
    %70 = arith.addf %69, %68 : vector<16x32xf32>
    %71 = arith.divf %69, %70 : vector<16x32xf32>
    %72 = vector.extract_strided_slice %65 {offsets = [0, 32], sizes = [16, 32], strides = [1, 1]} : vector<16x128xf32> to vector<16x32xf32>
    %73 = math.tanh %72 : vector<16x32xf32>
    %74 = vector.extract_strided_slice %65 {offsets = [0, 64], sizes = [16, 32], strides = [1, 1]} : vector<16x128xf32> to vector<16x32xf32>
    %75 = arith.negf %74 : vector<16x32xf32>
    %76 = math.exp %75 : vector<16x32xf32>
    %cst_19 = arith.constant 1.000000e+00 : f32
    %77 = vector.broadcast %cst_19 : f32 to vector<16x32xf32>
    %78 = arith.addf %77, %76 : vector<16x32xf32>
    %79 = arith.divf %77, %78 : vector<16x32xf32>
    %80 = arith.mulf %71, %73 : vector<16x32xf32>
    %81 = math.tanh %80 : vector<16x32xf32>
    %82 = arith.mulf %79, %81 : vector<16x32xf32>
    %83 = vector.extract_strided_slice %65 {offsets = [0, 96], sizes = [16, 32], strides = [1, 1]} : vector<16x128xf32> to vector<16x32xf32>
    %84 = arith.truncf %82 : vector<16x32xf32> to vector<16x32xbf16>
    %85 = vector.extract_strided_slice %19 {offsets = [0, 384], sizes = [32, 128], strides = [1, 1]} : vector<32x640xbf16> to vector<32x128xbf16>
    %cst_20 = arith.constant dense<0.000000e+00> : vector<16x128xf32>
    %86 = tpu.matmul %84, %85, %cst_20 {dimension_numbers = #tpu.dot_dimension_numbers<[1], [0], [0], [1], [0, 0, 1, 1], [], []>} : vector<16x32xbf16>, vector<32x128xbf16>, vector<16x128xf32> -> vector<16x128xf32>
    %87 = vector.extract_strided_slice %86 {offsets = [0, 0], sizes = [16, 32], strides = [1, 1]} : vector<16x128xf32> to vector<16x32xf32>
    %88 = arith.addf %83, %87 : vector<16x32xf32>
    %89 = vector.extract_strided_slice %1 {offsets = [8, 0], sizes = [1, 32], strides = [1, 1]} : vector<16x128xf32> to vector<1x32xf32>
    %90 = vector.broadcast %89 : vector<1x32xf32> to vector<16x32xf32>
    %91 = arith.addf %88, %90 : vector<16x32xf32>
    %cst_21 = arith.constant 0.000000e+00 : f32
    %92 = vector.broadcast %cst_21 : f32 to vector<16x32xf32>
    %93 = arith.maximumf %91, %92 : vector<16x32xf32>
    %94 = arith.truncf %93 : vector<16x32xf32> to vector<16x32xbf16>
    %95 = vector.extract_strided_slice %19 {offsets = [0, 512], sizes = [32, 128], strides = [1, 1]} : vector<32x640xbf16> to vector<32x128xbf16>
    %cst_22 = arith.constant dense<0.000000e+00> : vector<16x128xf32>
    %96 = tpu.matmul %94, %95, %cst_22 {dimension_numbers = #tpu.dot_dimension_numbers<[1], [0], [0], [1], [0, 0, 1, 1], [], []>} : vector<16x32xbf16>, vector<32x128xbf16>, vector<16x128xf32> -> vector<16x128xf32>
    %97 = vector.extract_strided_slice %1 {offsets = [9, 0], sizes = [1, 128], strides = [1, 1]} : vector<16x128xf32> to vector<1x128xf32>
    %98 = vector.broadcast %97 : vector<1x128xf32> to vector<16x128xf32>
    %99 = arith.addf %96, %98 : vector<16x128xf32>
    %c0_23 = arith.constant 0 : index
    %c0_24 = arith.constant 0 : index
    %100 = vector.load %arg5[%c0_23, %c0_24] : memref<16x128xf32, #tpu.memory_space<vmem>>, vector<16x128xf32>
    tpu.vector_store %arg5[%c0_23, %c0_24], %99 {strides = array<i32>} : memref<16x128xf32, #tpu.memory_space<vmem>>, vector<16x128xf32>,
    return
  }
}

</mosaic_0001>

<llo_original>
// kernel: tpu_custom_call.1
$region0: #{tpu_custom_call.1}
  #allocation0 [shape = 'u32[]', space=smem, size = 0x4, offset = 0x4, fixed_abs, tag = 'smem constant byte address 0x4 - core index']
  #allocation1 [shape = 'u32[144,128]{1,0:T(1,128)}', space=vmem, size = 0x12000, scoped, tag = 'internal scratch']
  %s0 = inlined_call_operand.hbm [shape: bf16[16,16], index: 0, kind: input, shape index: {}]
  %s1 = inlined_call_operand.hbm [shape: bf16[16,32], index: 1, kind: input, shape index: {}]
  %s2 = inlined_call_operand.hbm [shape: bf16[32,128], index: 2, kind: input, shape index: {}]
  %s3 = inlined_call_operand.hbm [shape: bf16[32,640], index: 3, kind: input, shape index: {}]
  %s4 = inlined_call_operand.hbm [shape: f32[16,128], index: 4, kind: input, shape index: {}]
  %s5 = inlined_call_operand.hbm [shape: f32[16,128], index: 5, kind: output, shape index: {}]
  %s6 = sld [smem:[#allocation0]]
  $region50: #{tpu_custom_call.1} parent=0
    _
  %s8 = ssub.s32 1, %s6
  %s9 = scalar_select 0, %s8, %s6
  $region1: #{tpu_custom_call.1} parent=0
    #allocation2 [shape = 'u8[4096]{0}', space=vmem, size = 0x1000, scoped, tag = 'input window, operand 0, single buffered']
    #allocation3 [shape = 's32[1]{0}', space=sflag, size = 0x4, scoped, tag = 'scoped memory for tpu_custom_call.1']
    #allocation4 [shape = 's32[1]{0}', space=sflag, size = 0x4, scoped, tag = 'scoped memory for tpu_custom_call.1']
    #allocation5 [shape = 'u8[4096]{0}', space=vmem, size = 0x1000, scoped, tag = 'input window, operand 1, single buffered']
    #allocation6 [shape = 's32[1]{0}', space=sflag, size = 0x4, scoped, tag = 'scoped memory for tpu_custom_call.1']
    #allocation7 [shape = 'u8[8192]{0}', space=vmem, size = 0x2000, scoped, tag = 'input window, operand 2, single buffered']
    #allocation8 [shape = 'u8[40960]{0}', space=vmem, size = 0xa000, scoped, tag = 'input window, operand 3, single buffered']
    #allocation9 [shape = 's32[1]{0}', space=sflag, size = 0x4, scoped, tag = 'scoped memory for tpu_custom_call.1']
    #allocation10 [shape = 'u8[8192]{0}', space=vmem, size = 0x2000, scoped, tag = 'input window, operand 4, single buffered']
    #allocation11 [shape = 'u8[8192]{0}', space=vmem, size = 0x2000, scoped, tag = 'output window, operand 0, single buffered']
    %10 = vsyncpa [#allocation3], 0
    %11 = vsyncpa [#allocation6], 0
    %12 = vsyncpa [#allocation9], 0
    %13 = vsyncpa [#allocation4], 0
    // Predicated region
    $region2: #{tpu_custom_call.1} parent=1 // pred_check
      _
    $region3: #{tpu_custom_call.1} parent=1 // pred_check_branch
      %15 = sbr.rel (0) target = $region5
    $region4: #{tpu_custom_call.1} parent=1 // pred_region
      %s17 = ssub.s32 128, 128
      %18 = vsyncadd [#allocation3], %s17
      %s19 = sshll.u32 [#allocation2], 4
      %s20 = int_to_ptr.vmem [resolvable:$true] %s19
      %25 = dma.hbm_to_vmem [thread:$0]  %s0, 128, %s20, [#allocation3], 64, 64, 4
    $region5: #{tpu_custom_call.1} parent=1 // pred_fallthru
      _
    // Predicated region
    $region6: #{tpu_custom_call.1} parent=1 // pred_check
      _
    $region7: #{tpu_custom_call.1} parent=1 // pred_check_branch
      %27 = sbr.rel (0) target = $region9
    $region8: #{tpu_custom_call.1} parent=1 // pred_region
      %s29 = ssub.s32 128, 128
      %30 = vsyncadd [#allocation6], %s29
      %s31 = sshll.u32 [#allocation5], 4
      %s32 = int_to_ptr.vmem [resolvable:$true] %s31
      %37 = dma.hbm_to_vmem [thread:$0]  %s1, 128, %s32, [#allocation6], 64, 64, 4
    $region9: #{tpu_custom_call.1} parent=1 // pred_fallthru
      _
    // Predicated region
    $region10: #{tpu_custom_call.1} parent=1 // pred_check
      _
    $region11: #{tpu_custom_call.1} parent=1 // pred_check_branch
      %39 = sbr.rel (0) target = $region13
    $region12: #{tpu_custom_call.1} parent=1 // pred_region
      %s41 = ssub.s32 256, 256
      %42 = vsyncadd [#allocation6], %s41
      %s43 = sshll.u32 [#allocation7], 4
      %s44 = int_to_ptr.vmem [resolvable:$true] %s43
      %49 = dma.hbm_to_vmem [thread:$0]  %s2, 256, %s44, [#allocation6], 64, 64, 4
    $region13: #{tpu_custom_call.1} parent=1 // pred_fallthru
      _
    // Predicated region
    $region14: #{tpu_custom_call.1} parent=1 // pred_check
      _
    $region15: #{tpu_custom_call.1} parent=1 // pred_check_branch
      %51 = sbr.rel (0) target = $region17
    $region16: #{tpu_custom_call.1} parent=1 // pred_region
      %s53 = ssub.s32 1280, 1280
      %54 = vsyncadd [#allocation9], %s53
      %s55 = sshll.u32 [#allocation8], 4
      %s56 = int_to_ptr.vmem [resolvable:$true] %s55
      %61 = dma.hbm_to_vmem [thread:$0]  %s3, 1280, %s56, [#allocation9], 320, 320, 20
    $region17: #{tpu_custom_call.1} parent=1 // pred_fallthru
      _
    // Predicated region
    $region18: #{tpu_custom_call.1} parent=1 // pred_check
      _
    $region19: #{tpu_custom_call.1} parent=1 // pred_check_branch
      %63 = sbr.rel (0) target = $region21
    $region20: #{tpu_custom_call.1} parent=1 // pred_region
      %s65 = ssub.s32 256, 256
      %66 = vsyncadd [#allocation9], %s65
      %s67 = sshll.u32 [#allocation10], 4
      %s68 = int_to_ptr.vmem [resolvable:$true] %s67
      %73 = dma.hbm_to_vmem [thread:$0]  %s4, 256, %s68, [#allocation9], 128, 128, 8
    $region21: #{tpu_custom_call.1} parent=1 // pred_fallthru
      _
    // Predicated region
    $region22: #{tpu_custom_call.1} parent=1 // pred_check
      _
    $region23: #{tpu_custom_call.1} parent=1 // pred_check_branch
      %75 = sbr.rel (0) target = $region25
    $region24: #{tpu_custom_call.1} parent=1 // pred_region
      %76 = dma.done [#allocation3], 128
    $region25: #{tpu_custom_call.1} parent=1 // pred_fallthru
      _
    // Predicated region
    $region26: #{tpu_custom_call.1} parent=1 // pred_check
      _
    $region27: #{tpu_custom_call.1} parent=1 // pred_check_branch
      %78 = sbr.rel (0) target = $region29
    $region28: #{tpu_custom_call.1} parent=1 // pred_region
      %79 = dma.done [#allocation6], 128
    $region29: #{tpu_custom_call.1} parent=1 // pred_fallthru
      _
    // Predicated region
    $region30: #{tpu_custom_call.1} parent=1 // pred_check
      _
    $region31: #{tpu_custom_call.1} parent=1 // pred_check_branch
      %81 = sbr.rel (0) target = $region33
    $region32: #{tpu_custom_call.1} parent=1 // pred_region
      %82 = dma.done [#allocation6], 256
    $region33: #{tpu_custom_call.1} parent=1 // pred_fallthru
      _
    // Predicated region
    $region34: #{tpu_custom_call.1} parent=1 // pred_check
      _
    $region35: #{tpu_custom_call.1} parent=1 // pred_check_branch
      %84 = sbr.rel (0) target = $region37
    $region36: #{tpu_custom_call.1} parent=1 // pred_region
      %85 = dma.done [#allocation9], 1280
    $region37: #{tpu_custom_call.1} parent=1 // pred_fallthru
      _
    // Predicated region
    $region38: #{tpu_custom_call.1} parent=1 // pred_check
      _
    $region39: #{tpu_custom_call.1} parent=1 // pred_check_branch
      %87 = sbr.rel (0) target = $region41
    $region40: #{tpu_custom_call.1} parent=1 // pred_region
      %88 = dma.done [#allocation9], 256
    $region41: #{tpu_custom_call.1} parent=1 // pred_fallthru
      _
    %v90 = vld [vmem:[#allocation2] sm:$0xf]
    %v91 = vld [vmem:[#allocation2 + $0x4] sm:$0xf]
    %v92 = vld [vmem:[#allocation10] sm:$0xff]
    %v93 = vld [vmem:[#allocation10 + $0x8] sm:$0xff]
    %v94 = vld [vmem:[#allocation5] sm:$0xf]
    %v95 = vld [vmem:[#allocation5 + $0x4] sm:$0xf]
    %v96 = vld [vmem:[#allocation7] sm:$0xf]
    %v97 = vld [vmem:[#allocation7 + $0x4] sm:$0xf]
    %v98 = vld [vmem:[#allocation7 + $0x8] sm:$0xf]
    %v99 = vld [vmem:[#allocation7 + $0xc] sm:$0xf]
    %v100 = vlaneseq
    %v101 = vshrl.u32 %v100, 7
    %v102 = vsub.s32 0, %v101
    %v103 = vrot.slane %v92, %v102
    %v106 = vunpack.c.l.b16 %v90
    %v107 = vunpack.c.l.b16 %v91
    %v108 = vpack.c.b16 %v107, %v106
    %v111 = vunpack.c.l.b16 %v94
    %v112 = vunpack.c.l.b16 %v95
    %v113 = vpack.c.b16 %v112, %v111
    %vm115 = vcmask 130048
    %v117 = vsel %vm115, %v108, 0
    %119 = vmatprep.subr.bf16.mxu0 0
    %120 = vmatpush1.bf16.msra.mxu0 0
    %121 = vmatprep.subr.bf16.mxu0 0
    %122 = vmatpush1.bf16.msra.mxu0 0
    %123 = vmatprep.subr.bf16.mxu0 0
    %124 = vmatpush1.bf16.msra.mxu0 0
    %125 = vmatprep.subr.bf16.mxu0 0
    %126 = vmatpush1.bf16.msra.mxu0 0
    %127 = vmatprep.subr.bf16.mxu0 0
    %128 = vmatpush1.bf16.msra.mxu0 0
    %129 = vmatprep.subr.bf16.mxu0 0
    %130 = vmatpush1.bf16.msra.mxu0 0
    %131 = vmatprep.subr.bf16.mxu0 0
    %132 = vmatpush1.bf16.msra.mxu0 0
    %133 = vmatprep.subr.bf16.mxu0 0
    %134 = vmatpush1.bf16.msra.mxu0 %v113
    %135 = vmatprep.subr.bf16.mxu0 0
    %136 = vmatpush2.bf16.msra.mxu0 0
    %137 = vmatprep.subr.bf16.mxu0 0
    %138 = vmatpush2.bf16.msra.mxu0 0
    %139 = vmatprep.subr.bf16.mxu0 0
    %140 = vmatpush2.bf16.msra.mxu0 0
    %141 = vmatprep.subr.bf16.mxu0 0
    %142 = vmatpush2.bf16.msra.mxu0 0
    %143 = vmatprep.subr.bf16.mxu0 0
    %144 = vmatpush2.bf16.msra.mxu0 0
    %145 = vmatprep.subr.bf16.mxu0 0
    %146 = vmatpush2.bf16.msra.mxu0 0
    %147 = vmatprep.subr.bf16.mxu0 0
    %148 = vmatpush2.bf16.msra.mxu0 0
    %149 = vmatprep.subr.bf16.mxu0 0
    %150 = vmatpush2.bf16.msra.mxu0 0
    %151 = vmatprep.mubr.bf16.mxu0 0
    %152 = vmatmul.mubr.bf16.gmra.mxu0 %v117
    %v153 = vpop.f32.mrf.mxu0
    %v154 = vadd.f32 %v103, %v153
    %v155 = vpop.f32.mrf.mxu0
    %v156 = vpop.f32.mrf.mxu0
    %v157 = vadd.f32 %v103, %v156
    %v158 = vpop.f32.mrf.mxu0
    %159 = vdwg.mxu0
    %v160 = vmax.f32 %v154, 0.0
    %v161 = vmax.f32 %v157, 0.0
    %v162 = vlaneseq
    %v163 = vshrl.u32 %v162, 7
    %v164 = vsub.s32 1, %v163
    %v165 = vrot.slane %v92, %v164
    %v166 = vmul.f32 %v160, %v165
    %v167 = vmul.f32 %v161, %v165
    %v168 = vlaneseq
    %v169 = vshrl.u32 %v168, 7
    %v170 = vsub.s32 2, %v169
    %v171 = vrot.slane %v92, %v170
    %v172 = vadd.f32 %v166, %v171
    %v173 = vadd.f32 %v167, %v171
    %v174 = vpack.c.bf16 %v173, %v172
    %v179 = vunpack.c.l.b16 %v96
    %v180 = vunpack.c.l.b16 %v97
    %v181 = vunpack.c.l.b16 %v98
    %v182 = vunpack.c.l.b16 %v99
    %v183 = vpack.c.b16 %v180, %v179
    %v184 = vpack.c.b16 %v182, %v181
    %vm187 = vcmask 261120
    %v189 = vsel %vm187, %v174, 0
    %191 = vmatprep.subr.bf16.mxu0 0
    %192 = vmatpush1.bf16.msra.mxu0 0
    %193 = vmatprep.subr.bf16.mxu0 0
    %194 = vmatpush1.bf16.msra.mxu0 0
    %195 = vmatprep.subr.bf16.mxu0 0
    %196 = vmatpush1.bf16.msra.mxu0 0
    %197 = vmatprep.subr.bf16.mxu0 0
    %198 = vmatpush1.bf16.msra.mxu0 0
    %199 = vmatprep.subr.bf16.mxu0 0
    %200 = vmatpush1.bf16.msra.mxu0 0
    %201 = vmatprep.subr.bf16.mxu0 0
    %202 = vmatpush1.bf16.msra.mxu0 0
    %203 = vmatprep.subr.bf16.mxu0 0
    %204 = vmatpush1.bf16.msra.mxu0 %v184
    %205 = vmatprep.subr.bf16.mxu0 0
    %206 = vmatpush1.bf16.msra.mxu0 %v183
    %207 = vmatprep.subr.bf16.mxu0 0
    %208 = vmatpush2.bf16.msra.mxu0 0
    %209 = vmatprep.subr.bf16.mxu0 0
    %210 = vmatpush2.bf16.msra.mxu0 0
    %211 = vmatprep.subr.bf16.mxu0 0
    %212 = vmatpush2.bf16.msra.mxu0 0
    %213 = vmatprep.subr.bf16.mxu0 0
    %214 = vmatpush2.bf16.msra.mxu0 0
    %215 = vmatprep.subr.bf16.mxu0 0
    %216 = vmatpush2.bf16.msra.mxu0 0
    %217 = vmatprep.subr.bf16.mxu0 0
    %218 = vmatpush2.bf16.msra.mxu0 0
    %219 = vmatprep.subr.bf16.mxu0 0
    %220 = vmatpush2.bf16.msra.mxu0 0
    %221 = vmatprep.subr.bf16.mxu0 0
    %222 = vmatpush2.bf16.msra.mxu0 0
    %223 = vmatprep.mubr.bf16.mxu0 0
    %224 = vmatmul.mubr.bf16.gmra.mxu0 %v189
    %v225 = vpop.f32.mrf.mxu0
    %v226 = vadd.f32 0.0, %v225
    %v227 = vpop.f32.mrf.mxu0
    %v228 = vpop.f32.mrf.mxu0
    %v229 = vadd.f32 0.0, %v228
    %v230 = vpop.f32.mrf.mxu0
    %231 = vdwg.mxu0
    %v232 = vpack.c.bf16 %v229, %v226
    %v233 = vld [vmem:[#allocation8] sm:$0xff]
    %v234 = vld [vmem:[#allocation8 + $0x8] sm:$0xff]
    %v235 = vld [vmem:[#allocation8 + $0x10] sm:$0xf]
    %v236 = vld [vmem:[#allocation8 + $0x14] sm:$0xff]
    %v237 = vld [vmem:[#allocation8 + $0x1c] sm:$0xff]
    %v238 = vld [vmem:[#allocation8 + $0x24] sm:$0xf]
    %v239 = vld [vmem:[#allocation8 + $0x28] sm:$0xff]
    %v240 = vld [vmem:[#allocation8 + $0x30] sm:$0xff]
    %v241 = vld [vmem:[#allocation8 + $0x38] sm:$0xf]
    %v242 = vld [vmem:[#allocation8 + $0x3c] sm:$0xff]
    %v243 = vld [vmem:[#allocation8 + $0x44] sm:$0xff]
    %v244 = vld [vmem:[#allocation8 + $0x4c] sm:$0xf]
    %245 = vmatprep.subr.bf16.mxu0 0
    %246 = vmatpush1.bf16.msra.mxu0 0
    %247 = vmatprep.subr.bf16.mxu0 0
    %248 = vmatpush1.bf16.msra.mxu0 0
    %249 = vmatprep.subr.bf16.mxu0 0
    %250 = vmatpush1.bf16.msra.mxu0 0
    %251 = vmatprep.subr.bf16.mxu0 0
    %252 = vmatpush1.bf16.msra.mxu0 0
    %253 = vmatprep.subr.bf16.mxu0 0
    %254 = vmatpush1.bf16.msra.mxu0 0
    %255 = vmatprep.subr.bf16.mxu0 0
    %256 = vmatpush1.bf16.msra.mxu0 0
    %257 = vmatprep.subr.bf16.mxu0 0
    %258 = vmatpush1.bf16.msra.mxu0 0
    %259 = vmatprep.subr.bf16.mxu0 0
    %260 = vmatpush1.bf16.msra.mxu0 %v232
    %261 = vmatprep.subr.bf16.mxu0 0
    %262 = vmatpush2.bf16.msra.mxu0 0
    %263 = vmatprep.subr.bf16.mxu0 0
    %264 = vmatpush2.bf16.msra.mxu0 0
    %265 = vmatprep.subr.bf16.mxu0 0
    %266 = vmatpush2.bf16.msra.mxu0 0
    %267 = vmatprep.subr.bf16.mxu0 0
    %268 = vmatpush2.bf16.msra.mxu0 0
    %269 = vmatprep.subr.bf16.mxu0 0
    %270 = vmatpush2.bf16.msra.mxu0 0
    %271 = vmatprep.subr.bf16.mxu0 0
    %272 = vmatpush2.bf16.msra.mxu0 0
    %273 = vmatprep.subr.bf16.mxu0 0
    %274 = vmatpush2.bf16.msra.mxu0 0
    %275 = vmatprep.subr.bf16.mxu0 0
    %276 = vmatpush2.bf16.msra.mxu0 0
    %277 = vmatprep.mubr.bf16.mxu0 0
    %278 = vmatmul.mubr.bf16.gmra.mxu0 %v117
    %v279 = vpop.f32.mrf.mxu0
    %v280 = vadd.f32 0.0, %v279
    %v281 = vpop.f32.mrf.mxu0
    %v282 = vpop.f32.mrf.mxu0
    %v283 = vadd.f32 0.0, %v282
    %v284 = vpop.f32.mrf.mxu0
    %285 = vdwg.mxu0
    %v286 = vlaneseq
    %v287 = vshrl.u32 %v286, 7
    %v288 = vsub.s32 3, %v287
    %v289 = vrot.slane %v92, %v288
    %291 = vrot.lane.b32.xlu0 %v289, 32
    %v292 = vpop.permute.xlu0 %291
    %v294 = vadd.f32 %v280, %v292
    %v295 = vadd.f32 %v283, %v292
    %v296 = vmax.f32 %v294, 0.0
    %v297 = vmax.f32 %v295, 0.0
    %v298 = vlaneseq
    %v299 = vshrl.u32 %v298, 7
    %v300 = vsub.s32 4, %v299
    %v301 = vrot.slane %v92, %v300
    %303 = vrot.lane.b32.xlu0 %v301, 32
    %v304 = vpop.permute.xlu0 %303
    %v306 = vmul.f32 %v296, %v304
    %v307 = vmul.f32 %v297, %v304
    %v308 = vlaneseq
    %v309 = vshrl.u32 %v308, 7
    %v310 = vsub.s32 5, %v309
    %v311 = vrot.slane %v92, %v310
    %313 = vrot.lane.b32.xlu0 %v311, 32
    %v314 = vpop.permute.xlu0 %313
    %v316 = vadd.f32 %v306, %v314
    %v317 = vadd.f32 %v307, %v314
    %v318 = vpack.c.bf16 %v317, %v316
    %320 = vrot.lane.b32.xlu0 %v318, 96
    %v321 = vpop.permute.xlu0 %320
    %v326 = vunpack.c.h.b16 %v233
    %v327 = vunpack.c.h.b16 %v236
    %v328 = vunpack.c.h.b16 %v239
    %v329 = vunpack.c.h.b16 %v242
    %v330 = vpack.c.b16 %v327, %v326
    %v331 = vpack.c.b16 %v329, %v328
    %v335 = vsel %vm187, %v321, 0
    %337 = vmatprep.subr.bf16.mxu0 0
    %338 = vmatpush1.bf16.msra.mxu0 0
    %339 = vmatprep.subr.bf16.mxu0 0
    %340 = vmatpush1.bf16.msra.mxu0 0
    %341 = vmatprep.subr.bf16.mxu0 0
    %342 = vmatpush1.bf16.msra.mxu0 0
    %343 = vmatprep.subr.bf16.mxu0 0
    %344 = vmatpush1.bf16.msra.mxu0 0
    %345 = vmatprep.subr.bf16.mxu0 0
    %346 = vmatpush1.bf16.msra.mxu0 0
    %347 = vmatprep.subr.bf16.mxu0 0
    %348 = vmatpush1.bf16.msra.mxu0 0
    %349 = vmatprep.subr.bf16.mxu0 0
    %350 = vmatpush1.bf16.msra.mxu0 %v331
    %351 = vmatprep.subr.bf16.mxu0 0
    %352 = vmatpush1.bf16.msra.mxu0 %v330
    %353 = vmatprep.subr.bf16.mxu0 0
    %354 = vmatpush2.bf16.msra.mxu0 0
    %355 = vmatprep.subr.bf16.mxu0 0
    %356 = vmatpush2.bf16.msra.mxu0 0
    %357 = vmatprep.subr.bf16.mxu0 0
    %358 = vmatpush2.bf16.msra.mxu0 0
    %359 = vmatprep.subr.bf16.mxu0 0
    %360 = vmatpush2.bf16.msra.mxu0 0
    %361 = vmatprep.subr.bf16.mxu0 0
    %362 = vmatpush2.bf16.msra.mxu0 0
    %363 = vmatprep.subr.bf16.mxu0 0
    %364 = vmatpush2.bf16.msra.mxu0 0
    %365 = vmatprep.subr.bf16.mxu0 0
    %366 = vmatpush2.bf16.msra.mxu0 0
    %367 = vmatprep.subr.bf16.mxu0 0
    %368 = vmatpush2.bf16.msra.mxu0 0
    %369 = vmatprep.mubr.bf16.mxu0 0
    %370 = vmatmul.mubr.bf16.gmra.mxu0 %v335
    %v371 = vpop.f32.mrf.mxu0
    %v372 = vadd.f32 0.0, %v371
    %v373 = vpop.f32.mrf.mxu0
    %v374 = vpop.f32.mrf.mxu0
    %v375 = vadd.f32 0.0, %v374
    %v376 = vpop.f32.mrf.mxu0
    %377 = vdwg.mxu0
    %v378 = vunpack.c.l.b16 %v233
    %v379 = vunpack.c.l.b16 %v236
    %v380 = vunpack.c.l.b16 %v239
    %v381 = vunpack.c.l.b16 %v242
    %v382 = vpack.c.b16 %v379, %v378
    %v383 = vpack.c.b16 %v381, %v380
    %v387 = vsel %vm187, %v232, 0
    %389 = vmatprep.subr.bf16.mxu0 0
    %390 = vmatpush1.bf16.msra.mxu0 0
    %391 = vmatprep.subr.bf16.mxu0 0
    %392 = vmatpush1.bf16.msra.mxu0 0
    %393 = vmatprep.subr.bf16.mxu0 0
    %394 = vmatpush1.bf16.msra.mxu0 0
    %395 = vmatprep.subr.bf16.mxu0 0
    %396 = vmatpush1.bf16.msra.mxu0 0
    %397 = vmatprep.subr.bf16.mxu0 0
    %398 = vmatpush1.bf16.msra.mxu0 0
    %399 = vmatprep.subr.bf16.mxu0 0
    %400 = vmatpush1.bf16.msra.mxu0 0
    %401 = vmatprep.subr.bf16.mxu0 0
    %402 = vmatpush1.bf16.msra.mxu0 %v383
    %403 = vmatprep.subr.bf16.mxu0 0
    %404 = vmatpush1.bf16.msra.mxu0 %v382
    %405 = vmatprep.subr.bf16.mxu0 0
    %406 = vmatpush2.bf16.msra.mxu0 0
    %407 = vmatprep.subr.bf16.mxu0 0
    %408 = vmatpush2.bf16.msra.mxu0 0
    %409 = vmatprep.subr.bf16.mxu0 0
    %410 = vmatpush2.bf16.msra.mxu0 0
    %411 = vmatprep.subr.bf16.mxu0 0
    %412 = vmatpush2.bf16.msra.mxu0 0
    %413 = vmatprep.subr.bf16.mxu0 0
    %414 = vmatpush2.bf16.msra.mxu0 0
    %415 = vmatprep.subr.bf16.mxu0 0
    %416 = vmatpush2.bf16.msra.mxu0 0
    %417 = vmatprep.subr.bf16.mxu0 0
    %418 = vmatpush2.bf16.msra.mxu0 0
    %419 = vmatprep.subr.bf16.mxu0 0
    %420 = vmatpush2.bf16.msra.mxu0 0
    %421 = vmatprep.mubr.bf16.mxu0 0
    %422 = vmatmul.mubr.bf16.gmra.mxu0 %v387
    %v423 = vpop.f32.mrf.mxu0
    %v424 = vadd.f32 %v372, %v423
    %v425 = vpop.f32.mrf.mxu0
    %v426 = vpop.f32.mrf.mxu0
    %v427 = vadd.f32 %v375, %v426
    %v428 = vpop.f32.mrf.mxu0
    %429 = vdwg.mxu0
    %v430 = vlaneseq
    %v431 = vshrl.u32 %v430, 7
    %v432 = vsub.s32 6, %v431
    %v433 = vrot.slane %v92, %v432
    %v434 = vadd.f32 %v424, %v433
    %v435 = vadd.f32 %v427, %v433
    %v436 = vxor.u32 %v434, 2147483648
    %v437 = vxor.u32 %v435, 2147483648
    %v438 = vmul.f32 %v436, 1.442695
    %v439 = vpow.pop %v438
    %v440 = vmul.f32 %v437, 1.442695
    %v441 = vpow.pop %v440
    %v442 = vadd.f32 %v439, 1.0
    %v443 = vadd.f32 %v441, 1.0
    %v444 = vrcp.pop %v442
    %v445 = vmul.f32 1.0, %v444
    %v446 = vrcp.pop %v443
    %v447 = vmul.f32 1.0, %v446
    %v448 = vtanh.pop %v434
    %v449 = vtanh.pop %v435
    %452 = vrot.lane.b32.xlu0 %v448, 96
    %v453 = vpop.permute.xlu0 %452
    %454 = vrot.lane.b32.xlu0 %v449, 96
    %v455 = vpop.permute.xlu0 %454
    %v458 = vmul.f32 %v445, %v453
    %v459 = vmul.f32 %v447, %v455
    %v460 = vtanh.pop %v458
    %v461 = vtanh.pop %v459
    %464 = vrot.lane.b32.xlu0 %v460, 64
    %v465 = vpop.permute.xlu0 %464
    %466 = vrot.lane.b32.xlu0 %v461, 64
    %v467 = vpop.permute.xlu0 %466
    %v470 = vmul.f32 %v445, %v465
    %v471 = vmul.f32 %v447, %v467
    %v472 = vpack.c.bf16 %v471, %v470
    %v473 = vlaneseq
    %v474 = vshrl.u32 %v473, 7
    %v475 = vsub.s32 7, %v474
    %v476 = vrot.slane %v92, %v475
    %478 = vrot.lane.b32.xlu0 %v472, 64
    %v479 = vpop.permute.xlu0 %478
    %v484 = vunpack.c.l.b16 %v234
    %v485 = vunpack.c.l.b16 %v237
    %v486 = vunpack.c.l.b16 %v240
    %v487 = vunpack.c.l.b16 %v243
    %v488 = vpack.c.b16 %v485, %v484
    %v489 = vpack.c.b16 %v487, %v486
    %v493 = vsel %vm187, %v479, 0
    %495 = vmatprep.subr.bf16.mxu0 0
    %496 = vmatpush1.bf16.msra.mxu0 0
    %497 = vmatprep.subr.bf16.mxu0 0
    %498 = vmatpush1.bf16.msra.mxu0 0
    %499 = vmatprep.subr.bf16.mxu0 0
    %500 = vmatpush1.bf16.msra.mxu0 0
    %501 = vmatprep.subr.bf16.mxu0 0
    %502 = vmatpush1.bf16.msra.mxu0 0
    %503 = vmatprep.subr.bf16.mxu0 0
    %504 = vmatpush1.bf16.msra.mxu0 0
    %505 = vmatprep.subr.bf16.mxu0 0
    %506 = vmatpush1.bf16.msra.mxu0 0
    %507 = vmatprep.subr.bf16.mxu0 0
    %508 = vmatpush1.bf16.msra.mxu0 %v489
    %509 = vmatprep.subr.bf16.mxu0 0
    %510 = vmatpush1.bf16.msra.mxu0 %v488
    %511 = vmatprep.subr.bf16.mxu0 0
    %512 = vmatpush2.bf16.msra.mxu0 0
    %513 = vmatprep.subr.bf16.mxu0 0
    %514 = vmatpush2.bf16.msra.mxu0 0
    %515 = vmatprep.subr.bf16.mxu0 0
    %516 = vmatpush2.bf16.msra.mxu0 0
    %517 = vmatprep.subr.bf16.mxu0 0
    %518 = vmatpush2.bf16.msra.mxu0 0
    %519 = vmatprep.subr.bf16.mxu0 0
    %520 = vmatpush2.bf16.msra.mxu0 0
    %521 = vmatprep.subr.bf16.mxu0 0
    %522 = vmatpush2.bf16.msra.mxu0 0
    %523 = vmatprep.subr.bf16.mxu0 0
    %524 = vmatpush2.bf16.msra.mxu0 0
    %525 = vmatprep.subr.bf16.mxu0 0
    %526 = vmatpush2.bf16.msra.mxu0 0
    %527 = vmatprep.mubr.bf16.mxu0 0
    %528 = vmatmul.mubr.bf16.gmra.mxu0 %v493
    %v529 = vpop.f32.mrf.mxu0
    %v530 = vadd.f32 %v476, %v529
    %v531 = vpop.f32.mrf.mxu0
    %v532 = vpop.f32.mrf.mxu0
    %v533 = vadd.f32 %v476, %v532
    %v534 = vpop.f32.mrf.mxu0
    %535 = vdwg.mxu0
    %v536 = vxor.u32 %v530, 2147483648
    %v537 = vxor.u32 %v533, 2147483648
    %v538 = vmul.f32 %v536, 1.442695
    %v539 = vpow.pop %v538
    %v540 = vmul.f32 %v537, 1.442695
    %v541 = vpow.pop %v540
    %v542 = vadd.f32 %v539, 1.0
    %v543 = vadd.f32 %v541, 1.0
    %v544 = vrcp.pop %v542
    %v545 = vmul.f32 1.0, %v544
    %v546 = vrcp.pop %v543
    %v547 = vmul.f32 1.0, %v546
    %v548 = vtanh.pop %v530
    %v549 = vtanh.pop %v533
    %552 = vrot.lane.b32.xlu0 %v548, 96
    %v553 = vpop.permute.xlu0 %552
    %554 = vrot.lane.b32.xlu0 %v549, 96
    %v555 = vpop.permute.xlu0 %554
    %v558 = vmul.f32 %v545, %v553
    %v559 = vmul.f32 %v547, %v555
    %v560 = vtanh.pop %v558
    %v561 = vtanh.pop %v559
    %564 = vrot.lane.b32.xlu0 %v560, 64
    %v565 = vpop.permute.xlu0 %564
    %566 = vrot.lane.b32.xlu0 %v561, 64
    %v567 = vpop.permute.xlu0 %566
    %v570 = vmul.f32 %v545, %v565
    %v571 = vmul.f32 %v547, %v567
    %v572 = vpack.c.bf16 %v571, %v570
    %574 = vrot.lane.b32.xlu0 %v572, 64
    %v575 = vpop.permute.xlu0 %574
    %v576 = vunpack.c.h.b16 %v234
    %v577 = vunpack.c.h.b16 %v237
    %v578 = vunpack.c.h.b16 %v240
    %v579 = vunpack.c.h.b16 %v243
    %v580 = vpack.c.b16 %v577, %v576
    %v581 = vpack.c.b16 %v579, %v578
    %v585 = vsel %vm187, %v575, 0
    %587 = vmatprep.subr.bf16.mxu0 0
    %588 = vmatpush1.bf16.msra.mxu0 0
    %589 = vmatprep.subr.bf16.mxu0 0
    %590 = vmatpush1.bf16.msra.mxu0 0
    %591 = vmatprep.subr.bf16.mxu0 0
    %592 = vmatpush1.bf16.msra.mxu0 0
    %593 = vmatprep.subr.bf16.mxu0 0
    %594 = vmatpush1.bf16.msra.mxu0 0
    %595 = vmatprep.subr.bf16.mxu0 0
    %596 = vmatpush1.bf16.msra.mxu0 0
    %597 = vmatprep.subr.bf16.mxu0 0
    %598 = vmatpush1.bf16.msra.mxu0 0
    %599 = vmatprep.subr.bf16.mxu0 0
    %600 = vmatpush1.bf16.msra.mxu0 %v581
    %601 = vmatprep.subr.bf16.mxu0 0
    %602 = vmatpush1.bf16.msra.mxu0 %v580
    %603 = vmatprep.subr.bf16.mxu0 0
    %604 = vmatpush2.bf16.msra.mxu0 0
    %605 = vmatprep.subr.bf16.mxu0 0
    %606 = vmatpush2.bf16.msra.mxu0 0
    %607 = vmatprep.subr.bf16.mxu0 0
    %608 = vmatpush2.bf16.msra.mxu0 0
    %609 = vmatprep.subr.bf16.mxu0 0
    %610 = vmatpush2.bf16.msra.mxu0 0
    %611 = vmatprep.subr.bf16.mxu0 0
    %612 = vmatpush2.bf16.msra.mxu0 0
    %613 = vmatprep.subr.bf16.mxu0 0
    %614 = vmatpush2.bf16.msra.mxu0 0
    %615 = vmatprep.subr.bf16.mxu0 0
    %616 = vmatpush2.bf16.msra.mxu0 0
    %617 = vmatprep.subr.bf16.mxu0 0
    %618 = vmatpush2.bf16.msra.mxu0 0
    %619 = vmatprep.mubr.bf16.mxu0 0
    %620 = vmatmul.mubr.bf16.gmra.mxu0 %v585
    %v621 = vpop.f32.mrf.mxu0
    %v622 = vadd.f32 0.0, %v621
    %v623 = vpop.f32.mrf.mxu0
    %v624 = vpop.f32.mrf.mxu0
    %v625 = vadd.f32 0.0, %v624
    %v626 = vpop.f32.mrf.mxu0
    %627 = vdwg.mxu0
    %630 = vrot.lane.b32.xlu0 %v622, 96
    %v631 = vpop.permute.xlu0 %630
    %632 = vrot.lane.b32.xlu0 %v625, 96
    %v633 = vpop.permute.xlu0 %632
    %v636 = vadd.f32 %v530, %v631
    %v637 = vadd.f32 %v533, %v633
    %v638 = vlaneseq
    %v639 = vshrl.u32 %v638, 7
    %v640 = vsub.s32 0, %v639
    %v641 = vrot.slane %v93, %v640
    %643 = vrot.lane.b32.xlu0 %v641, 96
    %v644 = vpop.permute.xlu0 %643
    %v646 = vadd.f32 %v636, %v644
    %v647 = vadd.f32 %v637, %v644
    %v648 = vmax.f32 %v646, 0.0
    %v649 = vmax.f32 %v647, 0.0
    %v650 = vpack.c.bf16 %v649, %v648
    %v651 = vlaneseq
    %v652 = vshrl.u32 %v651, 7
    %v653 = vsub.s32 1, %v652
    %v654 = vrot.slane %v93, %v653
    %656 = vrot.lane.b32.xlu0 %v650, 32
    %v657 = vpop.permute.xlu0 %656
    %v662 = vunpack.c.l.b16 %v235
    %v663 = vunpack.c.l.b16 %v238
    %v664 = vunpack.c.l.b16 %v241
    %v665 = vunpack.c.l.b16 %v244
    %v666 = vpack.c.b16 %v663, %v662
    %v667 = vpack.c.b16 %v665, %v664
    %v671 = vsel %vm187, %v657, 0
    %673 = vmatprep.subr.bf16.mxu0 0
    %674 = vmatpush1.bf16.msra.mxu0 0
    %675 = vmatprep.subr.bf16.mxu0 0
    %676 = vmatpush1.bf16.msra.mxu0 0
    %677 = vmatprep.subr.bf16.mxu0 0
    %678 = vmatpush1.bf16.msra.mxu0 0
    %679 = vmatprep.subr.bf16.mxu0 0
    %680 = vmatpush1.bf16.msra.mxu0 0
    %681 = vmatprep.subr.bf16.mxu0 0
    %682 = vmatpush1.bf16.msra.mxu0 0
    %683 = vmatprep.subr.bf16.mxu0 0
    %684 = vmatpush1.bf16.msra.mxu0 0
    %685 = vmatprep.subr.bf16.mxu0 0
    %686 = vmatpush1.bf16.msra.mxu0 %v667
    %687 = vmatprep.subr.bf16.mxu0 0
    %688 = vmatpush1.bf16.msra.mxu0 %v666
    %689 = vmatprep.subr.bf16.mxu0 0
    %690 = vmatpush2.bf16.msra.mxu0 0
    %691 = vmatprep.subr.bf16.mxu0 0
    %692 = vmatpush2.bf16.msra.mxu0 0
    %693 = vmatprep.subr.bf16.mxu0 0
    %694 = vmatpush2.bf16.msra.mxu0 0
    %695 = vmatprep.subr.bf16.mxu0 0
    %696 = vmatpush2.bf16.msra.mxu0 0
    %697 = vmatprep.subr.bf16.mxu0 0
    %698 = vmatpush2.bf16.msra.mxu0 0
    %699 = vmatprep.subr.bf16.mxu0 0
    %700 = vmatpush2.bf16.msra.mxu0 0
    %701 = vmatprep.subr.bf16.mxu0 0
    %702 = vmatpush2.bf16.msra.mxu0 0
    %703 = vmatprep.subr.bf16.mxu0 0
    %704 = vmatpush2.bf16.msra.mxu0 0
    %705 = vmatprep.mubr.bf16.mxu0 0
    %706 = vmatmul.mubr.bf16.gmra.mxu0 %v671
    %v707 = vpop.f32.mrf.mxu0
    %v708 = vadd.f32 %v654, %v707
    %v709 = vpop.f32.mrf.mxu0
    %v710 = vpop.f32.mrf.mxu0
    %v711 = vadd.f32 %v654, %v710
    %v712 = vpop.f32.mrf.mxu0
    %713 = vdwg.mxu0
    %714 = vst [vmem:[#allocation11] sm:$0xff] %v708
    %715 = vst [vmem:[#allocation11 + $0x8] sm:$0xff] %v711
    // Predicated region
    $region42: #{tpu_custom_call.1} parent=1 // pred_check
      _
    $region43: #{tpu_custom_call.1} parent=1 // pred_check_branch
      %717 = sbr.rel (0) target = $region45
    $region44: #{tpu_custom_call.1} parent=1 // pred_region
      %s719 = ssub.s32 256, 256
      %720 = vsyncadd [#allocation4], %s719
      %s721 = sshll.u32 [#allocation11], 4
      %s722 = int_to_ptr.vmem [resolvable:$true] %s721
      %727 = dma.vmem_to_hbm [thread:$0]  %s722, 256, %s5, [#allocation4], 128, 128, 8
    $region45: #{tpu_custom_call.1} parent=1 // pred_fallthru
      _
    // Predicated region
    $region46: #{tpu_custom_call.1} parent=1 // pred_check
      _
    $region47: #{tpu_custom_call.1} parent=1 // pred_check_branch
      %729 = sbr.rel (0) target = $region49
    $region48: #{tpu_custom_call.1} parent=1 // pred_region
      %730 = dma.done [#allocation4], 256
    $region49: #{tpu_custom_call.1} parent=1 // pred_fallthru
      _
    %731 = vsyncpa [#allocation3], 1
    %732 = vsyncpa [#allocation6], 1
    %733 = vsyncpa [#allocation9], 1
    %734 = vsyncpa [#allocation4], 1

</llo_original>
